<compile_context>
chip_gen: v5e
topology: v5e:2x2
jax: 0.10.0
libtpu: 0.0.40
codegen_flags: <defaults>
</compile_context>

<pallas_src>
import functools

import jax
import jax.numpy as jnp
from jax.experimental import pallas as pl
from jax.experimental.pallas import tpu as pltpu

_LANE = 128
_SUBLANE = 8


def _conv_relu_chain(x_ref, w_ref, b_ref, *, repet, cc):
    """Unrolled (1x1 conv + ReLU) chain on per-channel (t, 128) slabs.

    x_ref : (cc, t, 128) VMEM ref (lane-dense, full-vreg per channel)
    w_ref : (repet*cc*cc,) SMEM ref, row-major [r, cout, cin]
    b_ref : (repet*cc,)    SMEM ref, row-major [r, cout]

    Weights/biases are read as SMEM scalars and splatted — pure VPU FMAs,
    no lane/sublane broadcasts and no (mostly idle at C=4) MXU matmul.
    """
    h = [x_ref[ci].astype(jnp.float32) for ci in range(cc)]
    for r in range(repet):
        nxt = []
        for co in range(cc):
            acc = w_ref[r * cc * cc + co * cc + 0] * h[0]
            for ci in range(1, cc):
                acc = acc + w_ref[r * cc * cc + co * cc + ci] * h[ci]
            nxt.append(jnp.maximum(acc + b_ref[r * cc + co], 0.0))
        h = nxt
    return h


def _stats_kernel(x_ref, w_ref, b_ref, sum_ref, sq_ref, *, repet, cc):
    """Pass 1: per-channel lane-partial (C, 128) sum / sum-of-squares.

    Outputs are keyed on the batch grid axis ("parallel") and resident across
    the hw-tile axis ("arbitrary"); the final 128->1 lane reduce happens in
    plain JAX, keeping per-tile cross-lane XLU work out of the hot loop.
    """
    @pl.when(pl.program_id(1) == 0)
    def _():
        sum_ref[...] = jnp.zeros_like(sum_ref)
        sq_ref[...] = jnp.zeros_like(sq_ref)

    h = _conv_relu_chain(x_ref, w_ref, b_ref, repet=repet, cc=cc)
    for co in range(cc):
        hc = h[co]                                                   # (t, 128)
        sum_ref[co:co + 1, :] += jnp.sum(hc, axis=0, keepdims=True)  # (1, 128)
        sq_ref[co:co + 1, :] += jnp.sum(hc * hc, axis=0, keepdims=True)


def _norm_kernel(x_ref, w_ref, b_ref, scale_ref, shift_ref, o_ref, *, repet, cc):
    """Pass 2: recompute the cheap chain, apply BN as one scalar FMA/channel."""
    h = _conv_relu_chain(x_ref, w_ref, b_ref, repet=repet, cc=cc)
    for co in range(cc):
        o_ref[co] = (h[co] * scale_ref[co] + shift_ref[co]).astype(o_ref.dtype)


def _pick_hw_tiling(hw, c, itemsize, target_block_bytes=4 << 20):
    """Choose (t_total, t_tile): lane-packed rows per image and per block.

    Targets ~4 MiB input blocks (t_tile up to 2048 at C=4 f32) so the Pallas
    pipeline amortizes per-grid-step overhead, while double-buffered in+out
    blocks (~16 MiB in pass 2) stay inside v7x's tighter VMEM budget.
    """
    t_needed = -(-hw // _LANE)                       # ceil(hw / 128)
    max_t = max(_SUBLANE,
                (target_block_bytes // (c * _LANE * itemsize))
                // _SUBLANE * _SUBLANE)              # multiple of 8
    if t_needed <= max_t:
        return t_needed, t_needed                    # one hw-tile per image
    t_tile = max_t                                   # full (8,128) vregs
    t_total = -(-t_needed // t_tile) * t_tile        # pad HW axis to tile multiple
    return t_total, t_tile


def repet1x1_forward(x_nchw, weights, biases, gamma, beta, *, eps=1e-5,
                     target_block_bytes=4 << 20):
    """weights: (repet, Cout, Cin); biases: (repet, C); gamma/beta: (C,)."""
    n, c, hgt, wid = x_nchw.shape
    repet, cout, cin = weights.shape
    assert cout == c and cin == c
    hw = hgt * wid

    itemsize = jnp.dtype(x_nchw.dtype).itemsize
    t_total, t_tile = _pick_hw_tiling(hw, c, itemsize, target_block_bytes)
    hw_pad = t_total * _LANE
    nt = t_total // t_tile
    grid = (n, nt)

    # Glue is reshape-only (free); no NCHW<->NHWC transposes.
    x3 = x_nchw.reshape(n, c, hw)
    if hw_pad != hw:
        x3 = jnp.pad(x3, ((0, 0), (0, 0), (0, hw_pad - hw)))
    x4 = x3.reshape(n, c, t_total, _LANE)

    # Tiny params live in SMEM as flat 1-D arrays; kernels read scalars + splat.
    w_flat = weights.reshape(-1).astype(jnp.float32)     # (repet*c*c,)
    b_flat = biases.reshape(-1).astype(jnp.float32)      # (repet*c,)

    x_spec = pl.BlockSpec((None, c, t_tile, _LANE), lambda ni, ti: (ni, 0, ti, 0))
    smem_spec = pl.BlockSpec(memory_space=pltpu.MemorySpace.SMEM)
    vmem_limit = 48 << 20

    # ---- Pass 1: per-(image, channel) lane-partial sum / sum-of-squares ----
    psum, psq = pl.pallas_call(
        functools.partial(_stats_kernel, repet=repet, cc=c),
        out_shape=(jax.ShapeDtypeStruct((n, c, _LANE), jnp.float32),
                   jax.ShapeDtypeStruct((n, c, _LANE), jnp.float32)),
        grid=grid,
        in_specs=[x_spec, smem_spec, smem_spec],
        out_specs=(pl.BlockSpec((None, c, _LANE), lambda ni, ti: (ni, 0, 0)),
                   pl.BlockSpec((None, c, _LANE), lambda ni, ti: (ni, 0, 0))),
        compiler_params=pltpu.CompilerParams(
            dimension_semantics=("parallel", "arbitrary"),
            vmem_limit_bytes=vmem_limit),
    )(x4, w_flat, b_flat)

    # Tiny per-channel math in plain JAX between the passes.
    s = jnp.sum(psum, axis=(0, 2))      # (C,)
    ss = jnp.sum(psq, axis=(0, 2))      # (C,)
    if hw_pad != hw:
        # Padded positions are zero vectors; the chain maps them to a constant
        # per-channel value h0 — subtract that contribution from the stats.
        h0 = jnp.zeros((c,), jnp.float32)
        for r in range(repet):
            h0 = jnp.maximum(weights[r].astype(jnp.float32) @ h0
                             + biases[r].astype(jnp.float32), 0.0)
        pad_cnt = jnp.float32(n * (hw_pad - hw))
        s = s - pad_cnt * h0
        ss = ss - pad_cnt * h0 * h0

    cnt = jnp.float32(n * hw)
    mean = s / cnt
    var = jnp.maximum(ss / cnt - mean * mean, 0.0)        # biased var (BN training)
    inv = jax.lax.rsqrt(var + jnp.float32(eps))
    scale = gamma.astype(jnp.float32) * inv               # (C,)
    shift = beta.astype(jnp.float32) - mean * scale       # (C,)

    # ---- Pass 2: recompute chain per tile, apply BN, lane-dense stores -----
    y4 = pl.pallas_call(
        functools.partial(_norm_kernel, repet=repet, cc=c),
        out_shape=jax.ShapeDtypeStruct((n, c, t_total, _LANE), x_nchw.dtype),
        grid=grid,
        in_specs=[x_spec, smem_spec, smem_spec, smem_spec, smem_spec],
        out_specs=pl.BlockSpec((None, c, t_tile, _LANE),
                               lambda ni, ti: (ni, 0, ti, 0)),
        compiler_params=pltpu.CompilerParams(
            dimension_semantics=("parallel", "parallel"),
            vmem_limit_bytes=vmem_limit),
    )(x4, w_flat, b_flat, scale, shift)

    y3 = y4.reshape(n, c, hw_pad)
    if hw_pad != hw:
        y3 = y3[:, :, :hw]
    return y3.reshape(n, c, hgt, wid)


def repet1x1_reference(x_nchw, weights, biases, gamma, beta, *, eps=1e-5):
    """Pure-JAX reference mirroring the PyTorch module forward."""
    n, c, hgt, wid = x_nchw.shape
    h = jnp.transpose(x_nchw, (0, 2, 3, 1)).reshape(-1, c).astype(jnp.float32)
    for i in range(weights.shape[0]):
        h = h @ weights[i].T + biases[i]
        h = jnp.maximum(h, 0.0)
    mean = jnp.mean(h, axis=0, keepdims=True)
    var = jnp.mean((h - mean) ** 2, axis=0, keepdims=True)
    y = (h - mean) * jax.lax.rsqrt(var + eps) * gamma + beta
    return jnp.transpose(y.reshape(n, hgt, wid, c), (0, 3, 1, 2)).astype(x_nchw.dtype)


if __name__ == "__main__":
    # Small shapes consistent with Repet1x1(cin=4, repet=3) on a (2, 4, 16, 16) input.
    batch, cin, spatial, repet = 2, 4, 16, 3

    key = jax.random.PRNGKey(0)
    kx, kw, kb, kg, kbe = jax.random.split(key, 5)

    x = jax.random.normal(kx, (batch, cin, spatial, spatial), dtype=jnp.float32)
    weights = 0.3 * jax.random.normal(kw, (repet, cin, cin), dtype=jnp.float32)
    biases = 0.1 * jax.random.normal(kb, (repet, cin), dtype=jnp.float32)
    gamma = 1.0 + 0.1 * jax.random.normal(kg, (cin,), dtype=jnp.float32)
    beta = 0.05 * jax.random.normal(kbe, (cin,), dtype=jnp.float32)

    out = repet1x1_forward(x, weights, biases, gamma, beta)
    out = jax.block_until_ready(out)

    ref = repet1x1_reference(x, weights, biases, gamma, beta)
    assert out.shape == (batch, cin, spatial, spatial)
    assert jnp.allclose(out, ref, atol=1e-4, rtol=1e-4), "mismatch vs JAX reference"

    print("KERNEL_OK")
</pallas_src>

<mosaic_0001>
module attributes {stable_mosaic.version = 11 : i64} {
  func.func @_stats_kernel(%arg0: i32, %arg1: i32, %arg2: memref<1x4x2x128xf32, #tpu.memory_space<vmem>>, %arg3: memref<48xf32, #tpu.memory_space<smem>>, %arg4: memref<12xf32, #tpu.memory_space<smem>>, %arg5: memref<1x4x128xf32, #tpu.memory_space<vmem>>, %arg6: memref<1x4x128xf32, #tpu.memory_space<vmem>>) attributes {dimension_semantics = [#tpu.dimension_semantics<parallel>, #tpu.dimension_semantics<arbitrary>], iteration_bounds = array<i64: 2, 1>, scalar_prefetch = 0 : i64, scratch_operands = 0 : i64, tpu.core_type = #tpu.core_type<tc>, window_params = [{transform_indices = @transform_0, window_bounds = array<i64: 1, 4, 2, 128>}, {transform_indices = @transform_1, window_bounds = array<i64: 48>}, {transform_indices = @transform_2, window_bounds = array<i64: 12>}, {transform_indices = @transform_3, window_bounds = array<i64: 1, 4, 128>}, {transform_indices = @transform_4, window_bounds = array<i64: 1, 4, 128>}]} {
    %c0_i32 = arith.constant 0 : i32
    %0 = arith.cmpi eq, %arg1, %c0_i32 : i32
    %1 = arith.extui %0 : i1 to i32
    %c0_i32_0 = arith.constant 0 : i32
    %2 = arith.cmpi ne, %1, %c0_i32_0 : i32
    scf.if %2 {
      %cst_96 = arith.constant 0.000000e+00 : f32
      %319 = vector.broadcast %cst_96 : f32 to vector<4x128xf32>
      %c0_97 = arith.constant 0 : index
      %c0_98 = arith.constant 0 : index
      %c0_99 = arith.constant 0 : index
      %320 = vector.load %arg5[%c0_97, %c0_98, %c0_99] : memref<1x4x128xf32, #tpu.memory_space<vmem>>, vector<1x4x128xf32>
      %321 = vector.shape_cast %320 : vector<1x4x128xf32> to vector<4x128xf32>
      %322 = vector.shape_cast %319 : vector<4x128xf32> to vector<1x4x128xf32>
      tpu.vector_store %arg5[%c0_97, %c0_98, %c0_99], %322 {strides = array<i32>} : memref<1x4x128xf32, #tpu.memory_space<vmem>>, vector<1x4x128xf32>,
      %cst_100 = arith.constant 0.000000e+00 : f32
      %323 = vector.broadcast %cst_100 : f32 to vector<4x128xf32>
      %c0_101 = arith.constant 0 : index
      %c0_102 = arith.constant 0 : index
      %c0_103 = arith.constant 0 : index
      %324 = vector.load %arg6[%c0_101, %c0_102, %c0_103] : memref<1x4x128xf32, #tpu.memory_space<vmem>>, vector<1x4x128xf32>
      %325 = vector.shape_cast %324 : vector<1x4x128xf32> to vector<4x128xf32>
      %326 = vector.shape_cast %323 : vector<4x128xf32> to vector<1x4x128xf32>
      tpu.vector_store %arg6[%c0_101, %c0_102, %c0_103], %326 {strides = array<i32>} : memref<1x4x128xf32, #tpu.memory_space<vmem>>, vector<1x4x128xf32>,
    } else {
    }
    %c0 = arith.constant 0 : index
    %c0_1 = arith.constant 0 : index
    %c0_2 = arith.constant 0 : index
    %c0_3 = arith.constant 0 : index
    %3 = vector.load %arg2[%c0, %c0_1, %c0_2, %c0_3] : memref<1x4x2x128xf32, #tpu.memory_space<vmem>>, vector<1x1x2x128xf32>
    %4 = vector.shape_cast %3 : vector<1x1x2x128xf32> to vector<2x128xf32>
    %c0_4 = arith.constant 0 : index
    %c1 = arith.constant 1 : index
    %c0_5 = arith.constant 0 : index
    %c0_6 = arith.constant 0 : index
    %5 = vector.load %arg2[%c0_4, %c1, %c0_5, %c0_6] : memref<1x4x2x128xf32, #tpu.memory_space<vmem>>, vector<1x1x2x128xf32>
    %6 = vector.shape_cast %5 : vector<1x1x2x128xf32> to vector<2x128xf32>
    %c0_7 = arith.constant 0 : index
    %c2 = arith.constant 2 : index
    %c0_8 = arith.constant 0 : index
    %c0_9 = arith.constant 0 : index
    %7 = vector.load %arg2[%c0_7, %c2, %c0_8, %c0_9] : memref<1x4x2x128xf32, #tpu.memory_space<vmem>>, vector<1x1x2x128xf32>
    %8 = vector.shape_cast %7 : vector<1x1x2x128xf32> to vector<2x128xf32>
    %c0_10 = arith.constant 0 : index
    %c3 = arith.constant 3 : index
    %c0_11 = arith.constant 0 : index
    %c0_12 = arith.constant 0 : index
    %9 = vector.load %arg2[%c0_10, %c3, %c0_11, %c0_12] : memref<1x4x2x128xf32, #tpu.memory_space<vmem>>, vector<1x1x2x128xf32>
    %10 = vector.shape_cast %9 : vector<1x1x2x128xf32> to vector<2x128xf32>
    %c0_13 = arith.constant 0 : index
    %11 = memref.load %arg3[%c0_13] : memref<48xf32, #tpu.memory_space<smem>>
    %12 = vector.broadcast %11 : f32 to vector<2x128xf32>
    %13 = arith.mulf %12, %4 : vector<2x128xf32>
    %c1_14 = arith.constant 1 : index
    %14 = memref.load %arg3[%c1_14] : memref<48xf32, #tpu.memory_space<smem>>
    %15 = vector.broadcast %14 : f32 to vector<2x128xf32>
    %16 = arith.mulf %15, %6 : vector<2x128xf32>
    %17 = arith.addf %13, %16 : vector<2x128xf32>
    %c2_15 = arith.constant 2 : index
    %18 = memref.load %arg3[%c2_15] : memref<48xf32, #tpu.memory_space<smem>>
    %19 = vector.broadcast %18 : f32 to vector<2x128xf32>
    %20 = arith.mulf %19, %8 : vector<2x128xf32>
    %21 = arith.addf %17, %20 : vector<2x128xf32>
    %c3_16 = arith.constant 3 : index
    %22 = memref.load %arg3[%c3_16] : memref<48xf32, #tpu.memory_space<smem>>
    %23 = vector.broadcast %22 : f32 to vector<2x128xf32>
    %24 = arith.mulf %23, %10 : vector<2x128xf32>
    %25 = arith.addf %21, %24 : vector<2x128xf32>
    %c0_17 = arith.constant 0 : index
    %26 = memref.load %arg4[%c0_17] : memref<12xf32, #tpu.memory_space<smem>>
    %27 = vector.broadcast %26 : f32 to vector<2x128xf32>
    %28 = arith.addf %25, %27 : vector<2x128xf32>
    %cst = arith.constant 0.000000e+00 : f32
    %29 = vector.broadcast %cst : f32 to vector<2x128xf32>
    %30 = arith.maximumf %28, %29 : vector<2x128xf32>
    %c4 = arith.constant 4 : index
    %31 = memref.load %arg3[%c4] : memref<48xf32, #tpu.memory_space<smem>>
    %32 = vector.broadcast %31 : f32 to vector<2x128xf32>
    %33 = arith.mulf %32, %4 : vector<2x128xf32>
    %c5 = arith.constant 5 : index
    %34 = memref.load %arg3[%c5] : memref<48xf32, #tpu.memory_space<smem>>
    %35 = vector.broadcast %34 : f32 to vector<2x128xf32>
    %36 = arith.mulf %35, %6 : vector<2x128xf32>
    %37 = arith.addf %33, %36 : vector<2x128xf32>
    %c6 = arith.constant 6 : index
    %38 = memref.load %arg3[%c6] : memref<48xf32, #tpu.memory_space<smem>>
    %39 = vector.broadcast %38 : f32 to vector<2x128xf32>
    %40 = arith.mulf %39, %8 : vector<2x128xf32>
    %41 = arith.addf %37, %40 : vector<2x128xf32>
    %c7 = arith.constant 7 : index
    %42 = memref.load %arg3[%c7] : memref<48xf32, #tpu.memory_space<smem>>
    %43 = vector.broadcast %42 : f32 to vector<2x128xf32>
    %44 = arith.mulf %43, %10 : vector<2x128xf32>
    %45 = arith.addf %41, %44 : vector<2x128xf32>
    %c1_18 = arith.constant 1 : index
    %46 = memref.load %arg4[%c1_18] : memref<12xf32, #tpu.memory_space<smem>>
    %47 = vector.broadcast %46 : f32 to vector<2x128xf32>
    %48 = arith.addf %45, %47 : vector<2x128xf32>
    %cst_19 = arith.constant 0.000000e+00 : f32
    %49 = vector.broadcast %cst_19 : f32 to vector<2x128xf32>
    %50 = arith.maximumf %48, %49 : vector<2x128xf32>
    %c8 = arith.constant 8 : index
    %51 = memref.load %arg3[%c8] : memref<48xf32, #tpu.memory_space<smem>>
    %52 = vector.broadcast %51 : f32 to vector<2x128xf32>
    %53 = arith.mulf %52, %4 : vector<2x128xf32>
    %c9 = arith.constant 9 : index
    %54 = memref.load %arg3[%c9] : memref<48xf32, #tpu.memory_space<smem>>
    %55 = vector.broadcast %54 : f32 to vector<2x128xf32>
    %56 = arith.mulf %55, %6 : vector<2x128xf32>
    %57 = arith.addf %53, %56 : vector<2x128xf32>
    %c10 = arith.constant 10 : index
    %58 = memref.load %arg3[%c10] : memref<48xf32, #tpu.memory_space<smem>>
    %59 = vector.broadcast %58 : f32 to vector<2x128xf32>
    %60 = arith.mulf %59, %8 : vector<2x128xf32>
    %61 = arith.addf %57, %60 : vector<2x128xf32>
    %c11 = arith.constant 11 : index
    %62 = memref.load %arg3[%c11] : memref<48xf32, #tpu.memory_space<smem>>
    %63 = vector.broadcast %62 : f32 to vector<2x128xf32>
    %64 = arith.mulf %63, %10 : vector<2x128xf32>
    %65 = arith.addf %61, %64 : vector<2x128xf32>
    %c2_20 = arith.constant 2 : index
    %66 = memref.load %arg4[%c2_20] : memref<12xf32, #tpu.memory_space<smem>>
    %67 = vector.broadcast %66 : f32 to vector<2x128xf32>
    %68 = arith.addf %65, %67 : vector<2x128xf32>
    %cst_21 = arith.constant 0.000000e+00 : f32
    %69 = vector.broadcast %cst_21 : f32 to vector<2x128xf32>
    %70 = arith.maximumf %68, %69 : vector<2x128xf32>
    %c12 = arith.constant 12 : index
    %71 = memref.load %arg3[%c12] : memref<48xf32, #tpu.memory_space<smem>>
    %72 = vector.broadcast %71 : f32 to vector<2x128xf32>
    %73 = arith.mulf %72, %4 : vector<2x128xf32>
    %c13 = arith.constant 13 : index
    %74 = memref.load %arg3[%c13] : memref<48xf32, #tpu.memory_space<smem>>
    %75 = vector.broadcast %74 : f32 to vector<2x128xf32>
    %76 = arith.mulf %75, %6 : vector<2x128xf32>
    %77 = arith.addf %73, %76 : vector<2x128xf32>
    %c14 = arith.constant 14 : index
    %78 = memref.load %arg3[%c14] : memref<48xf32, #tpu.memory_space<smem>>
    %79 = vector.broadcast %78 : f32 to vector<2x128xf32>
    %80 = arith.mulf %79, %8 : vector<2x128xf32>
    %81 = arith.addf %77, %80 : vector<2x128xf32>
    %c15 = arith.constant 15 : index
    %82 = memref.load %arg3[%c15] : memref<48xf32, #tpu.memory_space<smem>>
    %83 = vector.broadcast %82 : f32 to vector<2x128xf32>
    %84 = arith.mulf %83, %10 : vector<2x128xf32>
    %85 = arith.addf %81, %84 : vector<2x128xf32>
    %c3_22 = arith.constant 3 : index
    %86 = memref.load %arg4[%c3_22] : memref<12xf32, #tpu.memory_space<smem>>
    %87 = vector.broadcast %86 : f32 to vector<2x128xf32>
    %88 = arith.addf %85, %87 : vector<2x128xf32>
    %cst_23 = arith.constant 0.000000e+00 : f32
    %89 = vector.broadcast %cst_23 : f32 to vector<2x128xf32>
    %90 = arith.maximumf %88, %89 : vector<2x128xf32>
    %c16 = arith.constant 16 : index
    %91 = memref.load %arg3[%c16] : memref<48xf32, #tpu.memory_space<smem>>
    %92 = vector.broadcast %91 : f32 to vector<2x128xf32>
    %93 = arith.mulf %92, %30 : vector<2x128xf32>
    %c17 = arith.constant 17 : index
    %94 = memref.load %arg3[%c17] : memref<48xf32, #tpu.memory_space<smem>>
    %95 = vector.broadcast %94 : f32 to vector<2x128xf32>
    %96 = arith.mulf %95, %50 : vector<2x128xf32>
    %97 = arith.addf %93, %96 : vector<2x128xf32>
    %c18 = arith.constant 18 : index
    %98 = memref.load %arg3[%c18] : memref<48xf32, #tpu.memory_space<smem>>
    %99 = vector.broadcast %98 : f32 to vector<2x128xf32>
    %100 = arith.mulf %99, %70 : vector<2x128xf32>
    %101 = arith.addf %97, %100 : vector<2x128xf32>
    %c19 = arith.constant 19 : index
    %102 = memref.load %arg3[%c19] : memref<48xf32, #tpu.memory_space<smem>>
    %103 = vector.broadcast %102 : f32 to vector<2x128xf32>
    %104 = arith.mulf %103, %90 : vector<2x128xf32>
    %105 = arith.addf %101, %104 : vector<2x128xf32>
    %c4_24 = arith.constant 4 : index
    %106 = memref.load %arg4[%c4_24] : memref<12xf32, #tpu.memory_space<smem>>
    %107 = vector.broadcast %106 : f32 to vector<2x128xf32>
    %108 = arith.addf %105, %107 : vector<2x128xf32>
    %cst_25 = arith.constant 0.000000e+00 : f32
    %109 = vector.broadcast %cst_25 : f32 to vector<2x128xf32>
    %110 = arith.maximumf %108, %109 : vector<2x128xf32>
    %c20 = arith.constant 20 : index
    %111 = memref.load %arg3[%c20] : memref<48xf32, #tpu.memory_space<smem>>
    %112 = vector.broadcast %111 : f32 to vector<2x128xf32>
    %113 = arith.mulf %112, %30 : vector<2x128xf32>
    %c21 = arith.constant 21 : index
    %114 = memref.load %arg3[%c21] : memref<48xf32, #tpu.memory_space<smem>>
    %115 = vector.broadcast %114 : f32 to vector<2x128xf32>
    %116 = arith.mulf %115, %50 : vector<2x128xf32>
    %117 = arith.addf %113, %116 : vector<2x128xf32>
    %c22 = arith.constant 22 : index
    %118 = memref.load %arg3[%c22] : memref<48xf32, #tpu.memory_space<smem>>
    %119 = vector.broadcast %118 : f32 to vector<2x128xf32>
    %120 = arith.mulf %119, %70 : vector<2x128xf32>
    %121 = arith.addf %117, %120 : vector<2x128xf32>
    %c23 = arith.constant 23 : index
    %122 = memref.load %arg3[%c23] : memref<48xf32, #tpu.memory_space<smem>>
    %123 = vector.broadcast %122 : f32 to vector<2x128xf32>
    %124 = arith.mulf %123, %90 : vector<2x128xf32>
    %125 = arith.addf %121, %124 : vector<2x128xf32>
    %c5_26 = arith.constant 5 : index
    %126 = memref.load %arg4[%c5_26] : memref<12xf32, #tpu.memory_space<smem>>
    %127 = vector.broadcast %126 : f32 to vector<2x128xf32>
    %128 = arith.addf %125, %127 : vector<2x128xf32>
    %cst_27 = arith.constant 0.000000e+00 : f32
    %129 = vector.broadcast %cst_27 : f32 to vector<2x128xf32>
    %130 = arith.maximumf %128, %129 : vector<2x128xf32>
    %c24 = arith.constant 24 : index
    %131 = memref.load %arg3[%c24] : memref<48xf32, #tpu.memory_space<smem>>
    %132 = vector.broadcast %131 : f32 to vector<2x128xf32>
    %133 = arith.mulf %132, %30 : vector<2x128xf32>
    %c25 = arith.constant 25 : index
    %134 = memref.load %arg3[%c25] : memref<48xf32, #tpu.memory_space<smem>>
    %135 = vector.broadcast %134 : f32 to vector<2x128xf32>
    %136 = arith.mulf %135, %50 : vector<2x128xf32>
    %137 = arith.addf %133, %136 : vector<2x128xf32>
    %c26 = arith.constant 26 : index
    %138 = memref.load %arg3[%c26] : memref<48xf32, #tpu.memory_space<smem>>
    %139 = vector.broadcast %138 : f32 to vector<2x128xf32>
    %140 = arith.mulf %139, %70 : vector<2x128xf32>
    %141 = arith.addf %137, %140 : vector<2x128xf32>
    %c27 = arith.constant 27 : index
    %142 = memref.load %arg3[%c27] : memref<48xf32, #tpu.memory_space<smem>>
    %143 = vector.broadcast %142 : f32 to vector<2x128xf32>
    %144 = arith.mulf %143, %90 : vector<2x128xf32>
    %145 = arith.addf %141, %144 : vector<2x128xf32>
    %c6_28 = arith.constant 6 : index
    %146 = memref.load %arg4[%c6_28] : memref<12xf32, #tpu.memory_space<smem>>
    %147 = vector.broadcast %146 : f32 to vector<2x128xf32>
    %148 = arith.addf %145, %147 : vector<2x128xf32>
    %cst_29 = arith.constant 0.000000e+00 : f32
    %149 = vector.broadcast %cst_29 : f32 to vector<2x128xf32>
    %150 = arith.maximumf %148, %149 : vector<2x128xf32>
    %c28 = arith.constant 28 : index
    %151 = memref.load %arg3[%c28] : memref<48xf32, #tpu.memory_space<smem>>
    %152 = vector.broadcast %151 : f32 to vector<2x128xf32>
    %153 = arith.mulf %152, %30 : vector<2x128xf32>
    %c29 = arith.constant 29 : index
    %154 = memref.load %arg3[%c29] : memref<48xf32, #tpu.memory_space<smem>>
    %155 = vector.broadcast %154 : f32 to vector<2x128xf32>
    %156 = arith.mulf %155, %50 : vector<2x128xf32>
    %157 = arith.addf %153, %156 : vector<2x128xf32>
    %c30 = arith.constant 30 : index
    %158 = memref.load %arg3[%c30] : memref<48xf32, #tpu.memory_space<smem>>
    %159 = vector.broadcast %158 : f32 to vector<2x128xf32>
    %160 = arith.mulf %159, %70 : vector<2x128xf32>
    %161 = arith.addf %157, %160 : vector<2x128xf32>
    %c31 = arith.constant 31 : index
    %162 = memref.load %arg3[%c31] : memref<48xf32, #tpu.memory_space<smem>>
    %163 = vector.broadcast %162 : f32 to vector<2x128xf32>
    %164 = arith.mulf %163, %90 : vector<2x128xf32>
    %165 = arith.addf %161, %164 : vector<2x128xf32>
    %c7_30 = arith.constant 7 : index
    %166 = memref.load %arg4[%c7_30] : memref<12xf32, #tpu.memory_space<smem>>
    %167 = vector.broadcast %166 : f32 to vector<2x128xf32>
    %168 = arith.addf %165, %167 : vector<2x128xf32>
    %cst_31 = arith.constant 0.000000e+00 : f32
    %169 = vector.broadcast %cst_31 : f32 to vector<2x128xf32>
    %170 = arith.maximumf %168, %169 : vector<2x128xf32>
    %c32 = arith.constant 32 : index
    %171 = memref.load %arg3[%c32] : memref<48xf32, #tpu.memory_space<smem>>
    %172 = vector.broadcast %171 : f32 to vector<2x128xf32>
    %173 = arith.mulf %172, %110 : vector<2x128xf32>
    %c33 = arith.constant 33 : index
    %174 = memref.load %arg3[%c33] : memref<48xf32, #tpu.memory_space<smem>>
    %175 = vector.broadcast %174 : f32 to vector<2x128xf32>
    %176 = arith.mulf %175, %130 : vector<2x128xf32>
    %177 = arith.addf %173, %176 : vector<2x128xf32>
    %c34 = arith.constant 34 : index
    %178 = memref.load %arg3[%c34] : memref<48xf32, #tpu.memory_space<smem>>
    %179 = vector.broadcast %178 : f32 to vector<2x128xf32>
    %180 = arith.mulf %179, %150 : vector<2x128xf32>
    %181 = arith.addf %177, %180 : vector<2x128xf32>
    %c35 = arith.constant 35 : index
    %182 = memref.load %arg3[%c35] : memref<48xf32, #tpu.memory_space<smem>>
    %183 = vector.broadcast %182 : f32 to vector<2x128xf32>
    %184 = arith.mulf %183, %170 : vector<2x128xf32>
    %185 = arith.addf %181, %184 : vector<2x128xf32>
    %c8_32 = arith.constant 8 : index
    %186 = memref.load %arg4[%c8_32] : memref<12xf32, #tpu.memory_space<smem>>
    %187 = vector.broadcast %186 : f32 to vector<2x128xf32>
    %188 = arith.addf %185, %187 : vector<2x128xf32>
    %cst_33 = arith.constant 0.000000e+00 : f32
    %189 = vector.broadcast %cst_33 : f32 to vector<2x128xf32>
    %190 = arith.maximumf %188, %189 : vector<2x128xf32>
    %c36 = arith.constant 36 : index
    %191 = memref.load %arg3[%c36] : memref<48xf32, #tpu.memory_space<smem>>
    %192 = vector.broadcast %191 : f32 to vector<2x128xf32>
    %193 = arith.mulf %192, %110 : vector<2x128xf32>
    %c37 = arith.constant 37 : index
    %194 = memref.load %arg3[%c37] : memref<48xf32, #tpu.memory_space<smem>>
    %195 = vector.broadcast %194 : f32 to vector<2x128xf32>
    %196 = arith.mulf %195, %130 : vector<2x128xf32>
    %197 = arith.addf %193, %196 : vector<2x128xf32>
    %c38 = arith.constant 38 : index
    %198 = memref.load %arg3[%c38] : memref<48xf32, #tpu.memory_space<smem>>
    %199 = vector.broadcast %198 : f32 to vector<2x128xf32>
    %200 = arith.mulf %199, %150 : vector<2x128xf32>
    %201 = arith.addf %197, %200 : vector<2x128xf32>
    %c39 = arith.constant 39 : index
    %202 = memref.load %arg3[%c39] : memref<48xf32, #tpu.memory_space<smem>>
    %203 = vector.broadcast %202 : f32 to vector<2x128xf32>
    %204 = arith.mulf %203, %170 : vector<2x128xf32>
    %205 = arith.addf %201, %204 : vector<2x128xf32>
    %c9_34 = arith.constant 9 : index
    %206 = memref.load %arg4[%c9_34] : memref<12xf32, #tpu.memory_space<smem>>
    %207 = vector.broadcast %206 : f32 to vector<2x128xf32>
    %208 = arith.addf %205, %207 : vector<2x128xf32>
    %cst_35 = arith.constant 0.000000e+00 : f32
    %209 = vector.broadcast %cst_35 : f32 to vector<2x128xf32>
    %210 = arith.maximumf %208, %209 : vector<2x128xf32>
    %c40 = arith.constant 40 : index
    %211 = memref.load %arg3[%c40] : memref<48xf32, #tpu.memory_space<smem>>
    %212 = vector.broadcast %211 : f32 to vector<2x128xf32>
    %213 = arith.mulf %212, %110 : vector<2x128xf32>
    %c41 = arith.constant 41 : index
    %214 = memref.load %arg3[%c41] : memref<48xf32, #tpu.memory_space<smem>>
    %215 = vector.broadcast %214 : f32 to vector<2x128xf32>
    %216 = arith.mulf %215, %130 : vector<2x128xf32>
    %217 = arith.addf %213, %216 : vector<2x128xf32>
    %c42 = arith.constant 42 : index
    %218 = memref.load %arg3[%c42] : memref<48xf32, #tpu.memory_space<smem>>
    %219 = vector.broadcast %218 : f32 to vector<2x128xf32>
    %220 = arith.mulf %219, %150 : vector<2x128xf32>
    %221 = arith.addf %217, %220 : vector<2x128xf32>
    %c43 = arith.constant 43 : index
    %222 = memref.load %arg3[%c43] : memref<48xf32, #tpu.memory_space<smem>>
    %223 = vector.broadcast %222 : f32 to vector<2x128xf32>
    %224 = arith.mulf %223, %170 : vector<2x128xf32>
    %225 = arith.addf %221, %224 : vector<2x128xf32>
    %c10_36 = arith.constant 10 : index
    %226 = memref.load %arg4[%c10_36] : memref<12xf32, #tpu.memory_space<smem>>
    %227 = vector.broadcast %226 : f32 to vector<2x128xf32>
    %228 = arith.addf %225, %227 : vector<2x128xf32>
    %cst_37 = arith.constant 0.000000e+00 : f32
    %229 = vector.broadcast %cst_37 : f32 to vector<2x128xf32>
    %230 = arith.maximumf %228, %229 : vector<2x128xf32>
    %c44 = arith.constant 44 : index
    %231 = memref.load %arg3[%c44] : memref<48xf32, #tpu.memory_space<smem>>
    %232 = vector.broadcast %231 : f32 to vector<2x128xf32>
    %233 = arith.mulf %232, %110 : vector<2x128xf32>
    %c45 = arith.constant 45 : index
    %234 = memref.load %arg3[%c45] : memref<48xf32, #tpu.memory_space<smem>>
    %235 = vector.broadcast %234 : f32 to vector<2x128xf32>
    %236 = arith.mulf %235, %130 : vector<2x128xf32>
    %237 = arith.addf %233, %236 : vector<2x128xf32>
    %c46 = arith.constant 46 : index
    %238 = memref.load %arg3[%c46] : memref<48xf32, #tpu.memory_space<smem>>
    %239 = vector.broadcast %238 : f32 to vector<2x128xf32>
    %240 = arith.mulf %239, %150 : vector<2x128xf32>
    %241 = arith.addf %237, %240 : vector<2x128xf32>
    %c47 = arith.constant 47 : index
    %242 = memref.load %arg3[%c47] : memref<48xf32, #tpu.memory_space<smem>>
    %243 = vector.broadcast %242 : f32 to vector<2x128xf32>
    %244 = arith.mulf %243, %170 : vector<2x128xf32>
    %245 = arith.addf %241, %244 : vector<2x128xf32>
    %c11_38 = arith.constant 11 : index
    %246 = memref.load %arg4[%c11_38] : memref<12xf32, #tpu.memory_space<smem>>
    %247 = vector.broadcast %246 : f32 to vector<2x128xf32>
    %248 = arith.addf %245, %247 : vector<2x128xf32>
    %cst_39 = arith.constant 0.000000e+00 : f32
    %249 = vector.broadcast %cst_39 : f32 to vector<2x128xf32>
    %250 = arith.maximumf %248, %249 : vector<2x128xf32>
    %c0_40 = arith.constant 0 : index
    %c0_41 = arith.constant 0 : index
    %c0_42 = arith.constant 0 : index
    %251 = vector.load %arg5[%c0_40, %c0_41, %c0_42] : memref<1x4x128xf32, #tpu.memory_space<vmem>>, vector<1x1x128xf32>
    %252 = vector.shape_cast %251 : vector<1x1x128xf32> to vector<1x128xf32>
    %cst_43 = arith.constant dense<0.000000e+00> : vector<128xf32>
    %253 = vector.multi_reduction <add>, %190, %cst_43 [0] : vector<2x128xf32> to vector<128xf32>
    %254 = vector.shape_cast %253 : vector<128xf32> to vector<1x128xf32>
    %255 = arith.addf %252, %254 : vector<1x128xf32>
    %c0_44 = arith.constant 0 : index
    %c0_45 = arith.constant 0 : index
    %c0_46 = arith.constant 0 : index
    %256 = vector.load %arg5[%c0_44, %c0_45, %c0_46] : memref<1x4x128xf32, #tpu.memory_space<vmem>>, vector<1x1x128xf32>
    %257 = vector.shape_cast %256 : vector<1x1x128xf32> to vector<1x128xf32>
    %258 = vector.shape_cast %255 : vector<1x128xf32> to vector<1x1x128xf32>
    tpu.vector_store %arg5[%c0_44, %c0_45, %c0_46], %258 {strides = array<i32>} : memref<1x4x128xf32, #tpu.memory_space<vmem>>, vector<1x1x128xf32>,
    %c0_47 = arith.constant 0 : index
    %c0_48 = arith.constant 0 : index
    %c0_49 = arith.constant 0 : index
    %259 = vector.load %arg6[%c0_47, %c0_48, %c0_49] : memref<1x4x128xf32, #tpu.memory_space<vmem>>, vector<1x1x128xf32>
    %260 = vector.shape_cast %259 : vector<1x1x128xf32> to vector<1x128xf32>
    %261 = arith.mulf %190, %190 : vector<2x128xf32>
    %cst_50 = arith.constant dense<0.000000e+00> : vector<128xf32>
    %262 = vector.multi_reduction <add>, %261, %cst_50 [0] : vector<2x128xf32> to vector<128xf32>
    %263 = vector.shape_cast %262 : vector<128xf32> to vector<1x128xf32>
    %264 = arith.addf %260, %263 : vector<1x128xf32>
    %c0_51 = arith.constant 0 : index
    %c0_52 = arith.constant 0 : index
    %c0_53 = arith.constant 0 : index
    %265 = vector.load %arg6[%c0_51, %c0_52, %c0_53] : memref<1x4x128xf32, #tpu.memory_space<vmem>>, vector<1x1x128xf32>
    %266 = vector.shape_cast %265 : vector<1x1x128xf32> to vector<1x128xf32>
    %267 = vector.shape_cast %264 : vector<1x128xf32> to vector<1x1x128xf32>
    tpu.vector_store %arg6[%c0_51, %c0_52, %c0_53], %267 {strides = array<i32>} : memref<1x4x128xf32, #tpu.memory_space<vmem>>, vector<1x1x128xf32>,
    %c0_54 = arith.constant 0 : index
    %c1_55 = arith.constant 1 : index
    %c0_56 = arith.constant 0 : index
    %268 = vector.load %arg5[%c0_54, %c1_55, %c0_56] : memref<1x4x128xf32, #tpu.memory_space<vmem>>, vector<1x1x128xf32>
    %269 = vector.shape_cast %268 : vector<1x1x128xf32> to vector<1x128xf32>
    %cst_57 = arith.constant dense<0.000000e+00> : vector<128xf32>
    %270 = vector.multi_reduction <add>, %210, %cst_57 [0] : vector<2x128xf32> to vector<128xf32>
    %271 = vector.shape_cast %270 : vector<128xf32> to vector<1x128xf32>
    %272 = arith.addf %269, %271 : vector<1x128xf32>
    %c0_58 = arith.constant 0 : index
    %c1_59 = arith.constant 1 : index
    %c0_60 = arith.constant 0 : index
    %273 = vector.load %arg5[%c0_58, %c1_59, %c0_60] : memref<1x4x128xf32, #tpu.memory_space<vmem>>, vector<1x1x128xf32>
    %274 = vector.shape_cast %273 : vector<1x1x128xf32> to vector<1x128xf32>
    %275 = vector.shape_cast %272 : vector<1x128xf32> to vector<1x1x128xf32>
    tpu.vector_store %arg5[%c0_58, %c1_59, %c0_60], %275 {strides = array<i32>} : memref<1x4x128xf32, #tpu.memory_space<vmem>>, vector<1x1x128xf32>,
    %c0_61 = arith.constant 0 : index
    %c1_62 = arith.constant 1 : index
    %c0_63 = arith.constant 0 : index
    %276 = vector.load %arg6[%c0_61, %c1_62, %c0_63] : memref<1x4x128xf32, #tpu.memory_space<vmem>>, vector<1x1x128xf32>
    %277 = vector.shape_cast %276 : vector<1x1x128xf32> to vector<1x128xf32>
    %278 = arith.mulf %210, %210 : vector<2x128xf32>
    %cst_64 = arith.constant dense<0.000000e+00> : vector<128xf32>
    %279 = vector.multi_reduction <add>, %278, %cst_64 [0] : vector<2x128xf32> to vector<128xf32>
    %280 = vector.shape_cast %279 : vector<128xf32> to vector<1x128xf32>
    %281 = arith.addf %277, %280 : vector<1x128xf32>
    %c0_65 = arith.constant 0 : index
    %c1_66 = arith.constant 1 : index
    %c0_67 = arith.constant 0 : index
    %282 = vector.load %arg6[%c0_65, %c1_66, %c0_67] : memref<1x4x128xf32, #tpu.memory_space<vmem>>, vector<1x1x128xf32>
    %283 = vector.shape_cast %282 : vector<1x1x128xf32> to vector<1x128xf32>
    %284 = vector.shape_cast %281 : vector<1x128xf32> to vector<1x1x128xf32>
    tpu.vector_store %arg6[%c0_65, %c1_66, %c0_67], %284 {strides = array<i32>} : memref<1x4x128xf32, #tpu.memory_space<vmem>>, vector<1x1x128xf32>,
    %c0_68 = arith.constant 0 : index
    %c2_69 = arith.constant 2 : index
    %c0_70 = arith.constant 0 : index
    %285 = vector.load %arg5[%c0_68, %c2_69, %c0_70] : memref<1x4x128xf32, #tpu.memory_space<vmem>>, vector<1x1x128xf32>
    %286 = vector.shape_cast %285 : vector<1x1x128xf32> to vector<1x128xf32>
    %cst_71 = arith.constant dense<0.000000e+00> : vector<128xf32>
    %287 = vector.multi_reduction <add>, %230, %cst_71 [0] : vector<2x128xf32> to vector<128xf32>
    %288 = vector.shape_cast %287 : vector<128xf32> to vector<1x128xf32>
    %289 = arith.addf %286, %288 : vector<1x128xf32>
    %c0_72 = arith.constant 0 : index
    %c2_73 = arith.constant 2 : index
    %c0_74 = arith.constant 0 : index
    %290 = vector.load %arg5[%c0_72, %c2_73, %c0_74] : memref<1x4x128xf32, #tpu.memory_space<vmem>>, vector<1x1x128xf32>
    %291 = vector.shape_cast %290 : vector<1x1x128xf32> to vector<1x128xf32>
    %292 = vector.shape_cast %289 : vector<1x128xf32> to vector<1x1x128xf32>
    tpu.vector_store %arg5[%c0_72, %c2_73, %c0_74], %292 {strides = array<i32>} : memref<1x4x128xf32, #tpu.memory_space<vmem>>, vector<1x1x128xf32>,
    %c0_75 = arith.constant 0 : index
    %c2_76 = arith.constant 2 : index
    %c0_77 = arith.constant 0 : index
    %293 = vector.load %arg6[%c0_75, %c2_76, %c0_77] : memref<1x4x128xf32, #tpu.memory_space<vmem>>, vector<1x1x128xf32>
    %294 = vector.shape_cast %293 : vector<1x1x128xf32> to vector<1x128xf32>
    %295 = arith.mulf %230, %230 : vector<2x128xf32>
    %cst_78 = arith.constant dense<0.000000e+00> : vector<128xf32>
    %296 = vector.multi_reduction <add>, %295, %cst_78 [0] : vector<2x128xf32> to vector<128xf32>
    %297 = vector.shape_cast %296 : vector<128xf32> to vector<1x128xf32>
    %298 = arith.addf %294, %297 : vector<1x128xf32>
    %c0_79 = arith.constant 0 : index
    %c2_80 = arith.constant 2 : index
    %c0_81 = arith.constant 0 : index
    %299 = vector.load %arg6[%c0_79, %c2_80, %c0_81] : memref<1x4x128xf32, #tpu.memory_space<vmem>>, vector<1x1x128xf32>
    %300 = vector.shape_cast %299 : vector<1x1x128xf32> to vector<1x128xf32>
    %301 = vector.shape_cast %298 : vector<1x128xf32> to vector<1x1x128xf32>
    tpu.vector_store %arg6[%c0_79, %c2_80, %c0_81], %301 {strides = array<i32>} : memref<1x4x128xf32, #tpu.memory_space<vmem>>, vector<1x1x128xf32>,
    %c0_82 = arith.constant 0 : index
    %c3_83 = arith.constant 3 : index
    %c0_84 = arith.constant 0 : index
    %302 = vector.load %arg5[%c0_82, %c3_83, %c0_84] : memref<1x4x128xf32, #tpu.memory_space<vmem>>, vector<1x1x128xf32>
    %303 = vector.shape_cast %302 : vector<1x1x128xf32> to vector<1x128xf32>
    %cst_85 = arith.constant dense<0.000000e+00> : vector<128xf32>
    %304 = vector.multi_reduction <add>, %250, %cst_85 [0] : vector<2x128xf32> to vector<128xf32>
    %305 = vector.shape_cast %304 : vector<128xf32> to vector<1x128xf32>
    %306 = arith.addf %303, %305 : vector<1x128xf32>
    %c0_86 = arith.constant 0 : index
    %c3_87 = arith.constant 3 : index
    %c0_88 = arith.constant 0 : index
    %307 = vector.load %arg5[%c0_86, %c3_87, %c0_88] : memref<1x4x128xf32, #tpu.memory_space<vmem>>, vector<1x1x128xf32>
    %308 = vector.shape_cast %307 : vector<1x1x128xf32> to vector<1x128xf32>
    %309 = vector.shape_cast %306 : vector<1x128xf32> to vector<1x1x128xf32>
    tpu.vector_store %arg5[%c0_86, %c3_87, %c0_88], %309 {strides = array<i32>} : memref<1x4x128xf32, #tpu.memory_space<vmem>>, vector<1x1x128xf32>,
    %c0_89 = arith.constant 0 : index
    %c3_90 = arith.constant 3 : index
    %c0_91 = arith.constant 0 : index
    %310 = vector.load %arg6[%c0_89, %c3_90, %c0_91] : memref<1x4x128xf32, #tpu.memory_space<vmem>>, vector<1x1x128xf32>
    %311 = vector.shape_cast %310 : vector<1x1x128xf32> to vector<1x128xf32>
    %312 = arith.mulf %250, %250 : vector<2x128xf32>
    %cst_92 = arith.constant dense<0.000000e+00> : vector<128xf32>
    %313 = vector.multi_reduction <add>, %312, %cst_92 [0] : vector<2x128xf32> to vector<128xf32>
    %314 = vector.shape_cast %313 : vector<128xf32> to vector<1x128xf32>
    %315 = arith.addf %311, %314 : vector<1x128xf32>
    %c0_93 = arith.constant 0 : index
    %c3_94 = arith.constant 3 : index
    %c0_95 = arith.constant 0 : index
    %316 = vector.load %arg6[%c0_93, %c3_94, %c0_95] : memref<1x4x128xf32, #tpu.memory_space<vmem>>, vector<1x1x128xf32>
    %317 = vector.shape_cast %316 : vector<1x1x128xf32> to vector<1x128xf32>
    %318 = vector.shape_cast %315 : vector<1x128xf32> to vector<1x1x128xf32>
    tpu.vector_store %arg6[%c0_93, %c3_94, %c0_95], %318 {strides = array<i32>} : memref<1x4x128xf32, #tpu.memory_space<vmem>>, vector<1x1x128xf32>,
    return
  }
  func.func @transform_0(%arg0: i32, %arg1: i32) -> (i32, i32, i32, i32) {
    %c0_i32 = arith.constant 0 : i32
    %c0_i32_0 = arith.constant 0 : i32
    %c0_i32_1 = arith.constant 0 : i32
    return %arg0, %c0_i32, %arg1, %c0_i32_0 : i32, i32, i32, i32
  }
  func.func @transform_1(%arg0: i32, %arg1: i32) -> i32 {
    %c0_i32 = arith.constant 0 : i32
    %c0_i32_0 = arith.constant 0 : i32
    return %c0_i32 : i32
  }
  func.func @transform_2(%arg0: i32, %arg1: i32) -> i32 {
    %c0_i32 = arith.constant 0 : i32
    %c0_i32_0 = arith.constant 0 : i32
    return %c0_i32 : i32
  }
  func.func @transform_3(%arg0: i32, %arg1: i32) -> (i32, i32, i32) {
    %c0_i32 = arith.constant 0 : i32
    %c0_i32_0 = arith.constant 0 : i32
    %c0_i32_1 = arith.constant 0 : i32
    return %arg0, %c0_i32, %c0_i32_0 : i32, i32, i32
  }
  func.func @transform_4(%arg0: i32, %arg1: i32) -> (i32, i32, i32) {
    %c0_i32 = arith.constant 0 : i32
    %c0_i32_0 = arith.constant 0 : i32
    %c0_i32_1 = arith.constant 0 : i32
    return %arg0, %c0_i32, %c0_i32_0 : i32, i32, i32
  }
}

</mosaic_0001>

<llo_original>
// kernel: tpu_custom_call.1
$region0: #{tpu_custom_call.1}
  #allocation0 [shape = 'u32[]', space=smem, size = 0x4, offset = 0x4, fixed_abs, tag = 'smem constant byte address 0x4 - core index']
  #allocation1 [shape = 'u32[72,128]{1,0:T(1,128)}', space=vmem, size = 0x9000, scoped, tag = 'internal scratch']
  %s0 = inlined_call_operand.hbm [shape: f32[2,4,2,128], index: 0, kind: input, shape index: {}]
  %s1 = inlined_call_operand.hbm [shape: f32[48], index: 1, kind: input, shape index: {}]
  %s2 = inlined_call_operand.vmem [shape: f32[12], index: 2, kind: input, shape index: {}]
  %s3 = inlined_call_operand.hbm [shape: f32[2,4,128], index: 3, kind: output, shape index: {0}]
  %s4 = inlined_call_operand.hbm [shape: f32[2,4,128], index: 4, kind: output, shape index: {1}]
  %5 = xla_tuple %s3, %s4
  %s6 = sld [smem:[#allocation0]]
  $region69: #{tpu_custom_call.1} parent=0
    _
  %s8 = ssub.s32 1, %s6
  %s9 = scalar_select 0, %s8, %s6
  $region1: #{tpu_custom_call.1} parent=0
    #allocation2 [shape = 'u8[8192]{0}', space=vmem, size = 0x2000, scoped, tag = 'input window, operand 0']
    #allocation3 [shape = 's32[2]{0}', space=sflag, size = 0x8, scoped, tag = 'scoped memory for tpu_custom_call.1']
    #allocation4 [shape = 's32[2]{0}', space=sflag, size = 0x8, scoped, tag = 'scoped memory for tpu_custom_call.1']
    #allocation5 [shape = 's32[2]{0}', space=sflag, size = 0x8, scoped, tag = 'scoped memory for tpu_custom_call.1']
    #allocation6 [shape = 's32[2]{0}', space=sflag, size = 0x8, scoped, tag = 'scoped memory for tpu_custom_call.1']
    #allocation7 [shape = 'u8[512]{0}', space=smem, size = 0x200, scoped, tag = 'input window, operand 1, single buffered']
    #allocation8 [shape = 'u8[512]{0}', space=smem, size = 0x200, scoped, tag = 'input window, operand 2, single buffered']
    #allocation9 [shape = 'u8[4096]{0}', space=vmem, size = 0x1000, scoped, tag = 'output window, operand 0']
    #allocation10 [shape = 'u8[4096]{0}', space=vmem, size = 0x1000, scoped, tag = 'output window, operand 1']
    #allocation11 [shape = 's32[2]{0}', space=sflag, size = 0x8, scoped, tag = 'scoped memory for tpu_custom_call.1']
    %10 = vsyncpa [#allocation3], 0
    %s11 = scalar_lea.sflag [#allocation3], 1
    %12 = vsyncpa %s11, 0
    %13 = vsyncpa [#allocation5], 0
    %14 = vsyncpa [#allocation6], 0
    %15 = vsyncpa [#allocation4], 0
    %s16 = scalar_lea.sflag [#allocation4], 1
    %17 = vsyncpa %s16, 0
    %18 = vsyncpa [#allocation11], 0
    %s19 = scalar_lea.sflag [#allocation11], 1
    %20 = vsyncpa %s19, 0
    loop: start=0, step=1, limit=4
    $region2: #{tpu_custom_call.1} parent=1 // loop_pre_header
      _
    $region3: #{tpu_custom_call.1} parent=1 // loop_header
      %s22 = sphi 0, %s26
      %p23 = scmp.ge.s32.totalorder %s22, 4
      %s29 = sphi 0, %s41
      %s30 = sphi 0, %s37
      %s31 = sphi 0, %s29
      %s32 = sphi 0, %s30
      %s33 = sphi 0, %s31
      %s34 = sphi 0, %s32
      %s46 = sphi 0, %s48
      %s49 = sphi 0, %s46
      %s50 = sphi 0, %s49
      %s66 = sphi 0, %s50
      %s70 = sphi 0, %s70
      %s72 = sphi 0, %s70
      %s73 = sphi 0, %s72
      %s87 = sphi 0, %s73
      %s91 = sphi 0, %s91
      %s93 = sphi 0, %s91
      %s94 = sphi 0, %s93
      %s108 = sphi 0, %s94
      %s114 = sphi 0, %s116
      %s117 = sphi 0, %s114
      %s118 = sphi 0, %s117
      %s134 = sphi 0, %s118
      %s140 = sphi 0, %s142
      %s143 = sphi 0, %s140
      %s144 = sphi 0, %s143
      %s160 = sphi 0, %s144
    $region4: #{tpu_custom_call.1} parent=1 // loop_header_branch
      %25 = sbr.rel (%p23) target = $region8
    $region5: #{tpu_custom_call.1} parent=1 // loop_body
      %s27 = ssub.s32 %s22, 1
      %s28 = ssub.s32 %s22, 2
      %s35 = sadd.s32 1, %s30
      %p36 = scmp.ge.s32.totalorder %s35, 1
      %s37 = scalar_select %p36, 0, %s35
      %s38 = sadd.s32 1, %s29
      %s39 = scalar_select %p36, %s38, %s29
      %p40 = scmp.ge.s32.totalorder %s39, 2
      %s41 = scalar_select %p40, 0, %s39
      %s42 = ssub.s32 %s29, %s41
      %s43 = ssub.s32 %s30, %s37
      %s44 = sor.u32 %s42, %s43
      %p45 = scmp.eq.s32.totalorder %s44, 0
      %s47 = sadd.s32 %s46, 1
      %s48 = scalar_select %p45, %s46, %s47
      %p51 = pneg %p45
      %p52 = scmp.eq.s32.totalorder %s22, 1
      %p53 = por %p51, %p52
      %p54 = scmp.ne.s32.totalorder %s46, %s49
      %p55 = scmp.eq.s32.totalorder %s22, 0
      %p56 = por %p54, %p55
      %p57 = scmp.ne.s32.totalorder %s46, %s49
      %p58 = scmp.eq.s32.totalorder %s27, 1
      %p59 = por %p57, %p58
      %p60 = scmp.ne.s32.totalorder %s49, %s50
      %p61 = scmp.eq.s32.totalorder %s27, 0
      %p62 = por %p60, %p61
      %p63 = scmp.ne.s32.totalorder %s49, %s50
      %p64 = scmp.eq.s32.totalorder %s28, 1
      %p65 = por %p63, %p64
      %p67 = scmp.ne.s32.totalorder %s50, %s66
      %p68 = scmp.eq.s32.totalorder %s28, 0
      %p69 = por %p67, %p68
      %s71 = sadd.s32 %s70, 1
      %p74 = scmp.eq.s32.totalorder %s22, 1
      %p75 = scmp.ne.s32.totalorder %s70, %s72
      %p76 = scmp.eq.s32.totalorder %s22, 0
      %p77 = por %p75, %p76
      %p78 = scmp.ne.s32.totalorder %s70, %s72
      %p79 = scmp.eq.s32.totalorder %s27, 1
      %p80 = por %p78, %p79
      %p81 = scmp.ne.s32.totalorder %s72, %s73
      %p82 = scmp.eq.s32.totalorder %s27, 0
      %p83 = por %p81, %p82
      %p84 = scmp.ne.s32.totalorder %s72, %s73
      %p85 = scmp.eq.s32.totalorder %s28, 1
      %p86 = por %p84, %p85
      %p88 = scmp.ne.s32.totalorder %s73, %s87
      %p89 = scmp.eq.s32.totalorder %s28, 0
      %p90 = por %p88, %p89
      %s92 = sadd.s32 %s91, 1
      %p95 = scmp.eq.s32.totalorder %s22, 1
      %p96 = scmp.ne.s32.totalorder %s91, %s93
      %p97 = scmp.eq.s32.totalorder %s22, 0
      %p98 = por %p96, %p97
      %p99 = scmp.ne.s32.totalorder %s91, %s93
      %p100 = scmp.eq.s32.totalorder %s27, 1
      %p101 = por %p99, %p100
      %p102 = scmp.ne.s32.totalorder %s93, %s94
      %p103 = scmp.eq.s32.totalorder %s27, 0
      %p104 = por %p102, %p103
      %p105 = scmp.ne.s32.totalorder %s93, %s94
      %p106 = scmp.eq.s32.totalorder %s28, 1
      %p107 = por %p105, %p106
      %p109 = scmp.ne.s32.totalorder %s94, %s108
      %p110 = scmp.eq.s32.totalorder %s28, 0
      %p111 = por %p109, %p110
      %s112 = ssub.s32 %s29, %s41
      %p113 = scmp.eq.s32.totalorder %s112, 0
      %s115 = sadd.s32 %s114, 1
      %s116 = scalar_select %p113, %s114, %s115
      %p119 = pneg %p113
      %p120 = scmp.eq.s32.totalorder %s22, 1
      %p121 = por %p119, %p120
      %p122 = scmp.ne.s32.totalorder %s114, %s117
      %p123 = scmp.eq.s32.totalorder %s22, 0
      %p124 = por %p122, %p123
      %p125 = scmp.ne.s32.totalorder %s114, %s117
      %p126 = scmp.eq.s32.totalorder %s27, 1
      %p127 = por %p125, %p126
      %p128 = scmp.ne.s32.totalorder %s117, %s118
      %p129 = scmp.eq.s32.totalorder %s27, 0
      %p130 = por %p128, %p129
      %p131 = scmp.ne.s32.totalorder %s117, %s118
      %p132 = scmp.eq.s32.totalorder %s28, 1
      %p133 = por %p131, %p132
      %p135 = scmp.ne.s32.totalorder %s118, %s134
      %p136 = scmp.eq.s32.totalorder %s28, 0
      %p137 = por %p135, %p136
      %s138 = ssub.s32 %s29, %s41
      %p139 = scmp.eq.s32.totalorder %s138, 0
      %s141 = sadd.s32 %s140, 1
      %s142 = scalar_select %p139, %s140, %s141
      %p145 = pneg %p139
      %p146 = scmp.eq.s32.totalorder %s22, 1
      %p147 = por %p145, %p146
      %p148 = scmp.ne.s32.totalorder %s140, %s143
      %p149 = scmp.eq.s32.totalorder %s22, 0
      %p150 = por %p148, %p149
      %p151 = scmp.ne.s32.totalorder %s140, %s143
      %p152 = scmp.eq.s32.totalorder %s27, 1
      %p153 = por %p151, %p152
      %p154 = scmp.ne.s32.totalorder %s143, %s144
      %p155 = scmp.eq.s32.totalorder %s27, 0
      %p156 = por %p154, %p155
      %p157 = scmp.ne.s32.totalorder %s143, %s144
      %p158 = scmp.eq.s32.totalorder %s28, 1
      %p159 = por %p157, %p158
      %p161 = scmp.ne.s32.totalorder %s144, %s160
      %p162 = scmp.eq.s32.totalorder %s28, 0
      %p163 = por %p161, %p162
      %p164 = scmp.le.s32.totalorder 1, %s22
      %p165 = scmp.lt.s32.totalorder %s22, 3
      %p166 = pnand %p164, %p165
      %p167 = pneg %p166
      // Predicated region
      $region9: #{tpu_custom_call.1} parent=5 // pred_check
        _
      $region10: #{tpu_custom_call.1} parent=5 // pred_check_branch
        %169 = sbr.rel (%p166) target = $region12
      $region11: #{tpu_custom_call.1} parent=5 // pred_region
        %s170 = ssub.s32 %s22, 1
        // Predicated region
        $region13: #{tpu_custom_call.1} parent=11 // pred_check
          %p171 = pneg %p83
        $region14: #{tpu_custom_call.1} parent=11 // pred_check_branch
          %173 = sbr.rel (%p171) target = $region16
        $region15: #{tpu_custom_call.1} parent=11 // pred_region
          %175 = vsyncadd [#allocation5], 0
          %s177 = sshll.u32 %s1, 4
          %s178 = int_to_ptr.hbm [resolvable:$true] %s177
          %180 = dma.hbm_to_smem %s178, 16, [#allocation7], [#allocation5]
        $region16: #{tpu_custom_call.1} parent=11 // pred_fallthru
          _
        // Predicated region
        $region17: #{tpu_custom_call.1} parent=11 // pred_check
          %p181 = pneg %p104
        $region18: #{tpu_custom_call.1} parent=11 // pred_check_branch
          %183 = sbr.rel (%p181) target = $region20
        $region19: #{tpu_custom_call.1} parent=11 // pred_region
          %185 = vsyncadd [#allocation6], 0
          %s187 = sshll.u32 %s2, 4
          %s188 = int_to_ptr.vmem [resolvable:$true] %s187
          %190 = dma.vmem_to_smem %s188, 16, [#allocation8], [#allocation6]
        $region20: #{tpu_custom_call.1} parent=11 // pred_fallthru
          _
      $region12: #{tpu_custom_call.1} parent=5 // pred_fallthru
        _
      %p191 = scmp.lt.s32.totalorder %s22, 2
      // Predicated region
      $region21: #{tpu_custom_call.1} parent=5 // pred_check
        %p192 = pneg %p191
      $region22: #{tpu_custom_call.1} parent=5 // pred_check_branch
        %194 = sbr.rel (%p192) target = $region24
      $region23: #{tpu_custom_call.1} parent=5 // pred_region
        // Predicated region
        $region25: #{tpu_custom_call.1} parent=23 // pred_check
          %p195 = pneg %p56
        $region26: #{tpu_custom_call.1} parent=23 // pred_check_branch
          %197 = sbr.rel (%p195) target = $region28
        $region27: #{tpu_custom_call.1} parent=23 // pred_region
          %s198 = sand.u32 %s46, 1
          %s199 = scalar_lea.sflag [#allocation3], %s198
          %s200 = sand.u32 %s46, 1
          %s201 = smul.addr %s200, 8
          %s202 = scalar_lea.vmem [#allocation2], %s201
          %204 = vsyncadd %s199, 0
          %s205 = smul.addr %s29, 4
          %s206 = sadd.s32 %s30, %s205
          %s207 = smul.addr %s206, 2
          %s208 = scalar_lea.hbm %s0, %s207
          %s209 = sshll.u32 %s208, 4
          %s210 = int_to_ptr.hbm [resolvable:$true] %s209
          %s211 = sshll.u32 %s202, 4
          %s212 = int_to_ptr.vmem [resolvable:$true] %s211
          %217 = dma.hbm_to_vmem [thread:$0]  %s210, 128, %s212, %s199, 32, 32, 2
        $region28: #{tpu_custom_call.1} parent=23 // pred_fallthru
          _
      $region24: #{tpu_custom_call.1} parent=5 // pred_fallthru
        _
      %p218 = scmp.le.s32.totalorder 1, %s22
      %p219 = scmp.lt.s32.totalorder %s22, 3
      %p220 = pnand %p218, %p219
      %p221 = pneg %p220
      // Predicated region
      $region29: #{tpu_custom_call.1} parent=5 // pred_check
        _
      $region30: #{tpu_custom_call.1} parent=5 // pred_check_branch
        %223 = sbr.rel (%p220) target = $region32
      $region31: #{tpu_custom_call.1} parent=5 // pred_region
        %s224 = ssub.s32 %s22, 1
        %s225 = sand.u32 %s49, 1
        %s226 = scalar_lea.sflag [#allocation3], %s225
        %s227 = sand.u32 %s49, 1
        %s228 = smul.addr %s227, 8
        %s229 = scalar_lea.vmem [#allocation2], %s228
        // Predicated region
        $region33: #{tpu_custom_call.1} parent=31 // pred_check
          %p230 = pneg %p62
        $region34: #{tpu_custom_call.1} parent=31 // pred_check_branch
          %232 = sbr.rel (%p230) target = $region36
        $region35: #{tpu_custom_call.1} parent=31 // pred_region
          %234 = dma.done %s226, 128
        $region36: #{tpu_custom_call.1} parent=31 // pred_fallthru
          _
        // Predicated region
        $region37: #{tpu_custom_call.1} parent=31 // pred_check
          %p235 = pneg %p83
        $region38: #{tpu_custom_call.1} parent=31 // pred_check_branch
          %237 = sbr.rel (%p235) target = $region40
        $region39: #{tpu_custom_call.1} parent=31 // pred_region
          %239 = dma.done [#allocation5], 16
        $region40: #{tpu_custom_call.1} parent=31 // pred_fallthru
          _
        // Predicated region
        $region41: #{tpu_custom_call.1} parent=31 // pred_check
          %p240 = pneg %p104
        $region42: #{tpu_custom_call.1} parent=31 // pred_check_branch
          %242 = sbr.rel (%p240) target = $region44
        $region43: #{tpu_custom_call.1} parent=31 // pred_region
          %244 = dma.done [#allocation6], 16
        $region44: #{tpu_custom_call.1} parent=31 // pred_fallthru
          _
        %245 = sfence
        %s246 = sand.u32 %s49, 1
        %s247 = scalar_lea.sflag [#allocation3], %s246
        %s248 = sand.u32 %s49, 1
        %s249 = smul.addr %s248, 8
        %s250 = scalar_lea.vmem [#allocation2], %s249
        %p251 = pneg %p62
        %p252 = pneg %p59
        %p253 = pneg %p83
        %p254 = pneg %p80
        %p255 = pneg %p104
        %p256 = pneg %p101
        %p257 = pneg %p130
        %p258 = pneg %p127
        %s259 = sand.u32 %s117, 1
        %s260 = scalar_lea.sflag [#allocation4], %s259
        %s261 = sand.u32 %s117, 1
        %s262 = smul.addr %s261, 4
        %s263 = scalar_lea.vmem [#allocation9], %s262
        %p264 = pneg %p156
        %p265 = pneg %p153
        %s266 = sand.u32 %s143, 1
        %s267 = scalar_lea.sflag [#allocation11], %s266
        %s268 = sand.u32 %s143, 1
        %s269 = smul.addr %s268, 4
        %s270 = scalar_lea.vmem [#allocation10], %s269
        %p271 = scmp.eq.s32.totalorder %s32, 0
        // Predicated region
        $region45: #{tpu_custom_call.1} parent=31 // pred_check
          %p272 = pneg %p271
        $region46: #{tpu_custom_call.1} parent=31 // pred_check_branch
          %274 = sbr.rel (%p272) target = $region48
        $region47: #{tpu_custom_call.1} parent=31 // pred_region
          %275 = vst [vmem:[%s263] sm:$0xf] 0.0
          %276 = vst [vmem:[%s270] sm:$0xf] 0.0
        $region48: #{tpu_custom_call.1} parent=31 // pred_fallthru
          _
        %v277 = vld [vmem:[%s229] sm:$0x3]
        %s278 = scalar_lea.vmem %s229, 2 [#allocation2]
        %v279 = vld [vmem:[%s278] sm:$0x3]
        %s280 = scalar_lea.vmem %s229, 4 [#allocation2]
        %v281 = vld [vmem:[%s280] sm:$0x3]
        %s282 = scalar_lea.vmem %s229, 6 [#allocation2]
        %v283 = vld [vmem:[%s282] sm:$0x3]
        %s284 = sld [smem:[#allocation7]]
        %v285 = vstv %s284
        %v286 = vmul.f32 %v285, %v277
        %s287 = sld [smem:[#allocation7 + $0x1]]
        %v288 = vstv %s287
        %v289 = vmul.f32 %v288, %v279
        %v290 = vadd.f32 %v286, %v289
        %s291 = sld [smem:[#allocation7 + $0x2]]
        %v292 = vstv %s291
        %v293 = vmul.f32 %v292, %v281
        %v294 = vadd.f32 %v290, %v293
        %s295 = sld [smem:[#allocation7 + $0x3]]
        %v296 = vstv %s295
        %v297 = vmul.f32 %v296, %v283
        %v298 = vadd.f32 %v294, %v297
        %s299 = sld [smem:[#allocation8]]
        %v300 = vstv %s299
        %v301 = vadd.f32 %v298, %v300
        %v302 = vmax.f32 %v301, 0.0
        %s303 = sld [smem:[#allocation7 + $0x4]]
        %v304 = vstv %s303
        %v305 = vmul.f32 %v304, %v277
        %s306 = sld [smem:[#allocation7 + $0x5]]
        %v307 = vstv %s306
        %v308 = vmul.f32 %v307, %v279
        %v309 = vadd.f32 %v305, %v308
        %s310 = sld [smem:[#allocation7 + $0x6]]
        %v311 = vstv %s310
        %v312 = vmul.f32 %v311, %v281
        %v313 = vadd.f32 %v309, %v312
        %s314 = sld [smem:[#allocation7 + $0x7]]
        %v315 = vstv %s314
        %v316 = vmul.f32 %v315, %v283
        %v317 = vadd.f32 %v313, %v316
        %s318 = sld [smem:[#allocation8 + $0x1]]
        %v319 = vstv %s318
        %v320 = vadd.f32 %v317, %v319
        %v321 = vmax.f32 %v320, 0.0
        %s322 = sld [smem:[#allocation7 + $0x8]]
        %v323 = vstv %s322
        %v324 = vmul.f32 %v323, %v277
        %s325 = sld [smem:[#allocation7 + $0x9]]
        %v326 = vstv %s325
        %v327 = vmul.f32 %v326, %v279
        %v328 = vadd.f32 %v324, %v327
        %s329 = sld [smem:[#allocation7 + $0xa]]
        %v330 = vstv %s329
        %v331 = vmul.f32 %v330, %v281
        %v332 = vadd.f32 %v328, %v331
        %s333 = sld [smem:[#allocation7 + $0xb]]
        %v334 = vstv %s333
        %v335 = vmul.f32 %v334, %v283
        %v336 = vadd.f32 %v332, %v335
        %s337 = sld [smem:[#allocation8 + $0x2]]
        %v338 = vstv %s337
        %v339 = vadd.f32 %v336, %v338
        %v340 = vmax.f32 %v339, 0.0
        %s341 = sld [smem:[#allocation7 + $0xc]]
        %v342 = vstv %s341
        %v343 = vmul.f32 %v342, %v277
        %s344 = sld [smem:[#allocation7 + $0xd]]
        %v345 = vstv %s344
        %v346 = vmul.f32 %v345, %v279
        %v347 = vadd.f32 %v343, %v346
        %s348 = sld [smem:[#allocation7 + $0xe]]
        %v349 = vstv %s348
        %v350 = vmul.f32 %v349, %v281
        %v351 = vadd.f32 %v347, %v350
        %s352 = sld [smem:[#allocation7 + $0xf]]
        %v353 = vstv %s352
        %v354 = vmul.f32 %v353, %v283
        %v355 = vadd.f32 %v351, %v354
        %s356 = sld [smem:[#allocation8 + $0x3]]
        %v357 = vstv %s356
        %v358 = vadd.f32 %v355, %v357
        %v359 = vmax.f32 %v358, 0.0
        %s360 = sld [smem:[#allocation7 + $0x10]]
        %v361 = vstv %s360
        %v362 = vmul.f32 %v361, %v302
        %s363 = sld [smem:[#allocation7 + $0x11]]
        %v364 = vstv %s363
        %v365 = vmul.f32 %v364, %v321
        %v366 = vadd.f32 %v362, %v365
        %s367 = sld [smem:[#allocation7 + $0x12]]
        %v368 = vstv %s367
        %v369 = vmul.f32 %v368, %v340
        %v370 = vadd.f32 %v366, %v369
        %s371 = sld [smem:[#allocation7 + $0x13]]
        %v372 = vstv %s371
        %v373 = vmul.f32 %v372, %v359
        %v374 = vadd.f32 %v370, %v373
        %s375 = sld [smem:[#allocation8 + $0x4]]
        %v376 = vstv %s375
        %v377 = vadd.f32 %v374, %v376
        %v378 = vmax.f32 %v377, 0.0
        %s379 = sld [smem:[#allocation7 + $0x14]]
        %v380 = vstv %s379
        %v381 = vmul.f32 %v380, %v302
        %s382 = sld [smem:[#allocation7 + $0x15]]
        %v383 = vstv %s382
        %v384 = vmul.f32 %v383, %v321
        %v385 = vadd.f32 %v381, %v384
        %s386 = sld [smem:[#allocation7 + $0x16]]
        %v387 = vstv %s386
        %v388 = vmul.f32 %v387, %v340
        %v389 = vadd.f32 %v385, %v388
        %s390 = sld [smem:[#allocation7 + $0x17]]
        %v391 = vstv %s390
        %v392 = vmul.f32 %v391, %v359
        %v393 = vadd.f32 %v389, %v392
        %s394 = sld [smem:[#allocation8 + $0x5]]
        %v395 = vstv %s394
        %v396 = vadd.f32 %v393, %v395
        %v397 = vmax.f32 %v396, 0.0
        %s398 = sld [smem:[#allocation7 + $0x18]]
        %v399 = vstv %s398
        %v400 = vmul.f32 %v399, %v302
        %s401 = sld [smem:[#allocation7 + $0x19]]
        %v402 = vstv %s401
        %v403 = vmul.f32 %v402, %v321
        %v404 = vadd.f32 %v400, %v403
        %s405 = sld [smem:[#allocation7 + $0x1a]]
        %v406 = vstv %s405
        %v407 = vmul.f32 %v406, %v340
        %v408 = vadd.f32 %v404, %v407
        %s409 = sld [smem:[#allocation7 + $0x1b]]
        %v410 = vstv %s409
        %v411 = vmul.f32 %v410, %v359
        %v412 = vadd.f32 %v408, %v411
        %s413 = sld [smem:[#allocation8 + $0x6]]
        %v414 = vstv %s413
        %v415 = vadd.f32 %v412, %v414
        %v416 = vmax.f32 %v415, 0.0
        %s417 = sld [smem:[#allocation7 + $0x1c]]
        %v418 = vstv %s417
        %v419 = vmul.f32 %v418, %v302
        %s420 = sld [smem:[#allocation7 + $0x1d]]
        %v421 = vstv %s420
        %v422 = vmul.f32 %v421, %v321
        %v423 = vadd.f32 %v419, %v422
        %s424 = sld [smem:[#allocation7 + $0x1e]]
        %v425 = vstv %s424
        %v426 = vmul.f32 %v425, %v340
        %v427 = vadd.f32 %v423, %v426
        %s428 = sld [smem:[#allocation7 + $0x1f]]
        %v429 = vstv %s428
        %v430 = vmul.f32 %v429, %v359
        %v431 = vadd.f32 %v427, %v430
        %s432 = sld [smem:[#allocation8 + $0x7]]
        %v433 = vstv %s432
        %v434 = vadd.f32 %v431, %v433
        %v435 = vmax.f32 %v434, 0.0
        %s436 = sld [smem:[#allocation7 + $0x20]]
        %v437 = vstv %s436
        %v438 = vmul.f32 %v437, %v378
        %s439 = sld [smem:[#allocation7 + $0x21]]
        %v440 = vstv %s439
        %v441 = vmul.f32 %v440, %v397
        %v442 = vadd.f32 %v438, %v441
        %s443 = sld [smem:[#allocation7 + $0x22]]
        %v444 = vstv %s443
        %v445 = vmul.f32 %v444, %v416
        %v446 = vadd.f32 %v442, %v445
        %s447 = sld [smem:[#allocation7 + $0x23]]
        %v448 = vstv %s447
        %v449 = vmul.f32 %v448, %v435
        %v450 = vadd.f32 %v446, %v449
        %s451 = sld [smem:[#allocation8 + $0x8]]
        %v452 = vstv %s451
        %v453 = vadd.f32 %v450, %v452
        %v454 = vmax.f32 %v453, 0.0
        %s455 = sld [smem:[#allocation7 + $0x24]]
        %v456 = vstv %s455
        %v457 = vmul.f32 %v456, %v378
        %s458 = sld [smem:[#allocation7 + $0x25]]
        %v459 = vstv %s458
        %v460 = vmul.f32 %v459, %v397
        %v461 = vadd.f32 %v457, %v460
        %s462 = sld [smem:[#allocation7 + $0x26]]
        %v463 = vstv %s462
        %v464 = vmul.f32 %v463, %v416
        %v465 = vadd.f32 %v461, %v464
        %s466 = sld [smem:[#allocation7 + $0x27]]
        %v467 = vstv %s466
        %v468 = vmul.f32 %v467, %v435
        %v469 = vadd.f32 %v465, %v468
        %s470 = sld [smem:[#allocation8 + $0x9]]
        %v471 = vstv %s470
        %v472 = vadd.f32 %v469, %v471
        %v473 = vmax.f32 %v472, 0.0
        %s474 = sld [smem:[#allocation7 + $0x28]]
        %v475 = vstv %s474
        %v476 = vmul.f32 %v475, %v378
        %s477 = sld [smem:[#allocation7 + $0x29]]
        %v478 = vstv %s477
        %v479 = vmul.f32 %v478, %v397
        %v480 = vadd.f32 %v476, %v479
        %s481 = sld [smem:[#allocation7 + $0x2a]]
        %v482 = vstv %s481
        %v483 = vmul.f32 %v482, %v416
        %v484 = vadd.f32 %v480, %v483
        %s485 = sld [smem:[#allocation7 + $0x2b]]
        %v486 = vstv %s485
        %v487 = vmul.f32 %v486, %v435
        %v488 = vadd.f32 %v484, %v487
        %s489 = sld [smem:[#allocation8 + $0xa]]
        %v490 = vstv %s489
        %v491 = vadd.f32 %v488, %v490
        %v492 = vmax.f32 %v491, 0.0
        %s493 = sld [smem:[#allocation7 + $0x2c]]
        %v494 = vstv %s493
        %v495 = vmul.f32 %v494, %v378
        %s496 = sld [smem:[#allocation7 + $0x2d]]
        %v497 = vstv %s496
        %v498 = vmul.f32 %v497, %v397
        %v499 = vadd.f32 %v495, %v498
        %s500 = sld [smem:[#allocation7 + $0x2e]]
        %v501 = vstv %s500
        %v502 = vmul.f32 %v501, %v416
        %v503 = vadd.f32 %v499, %v502
        %s504 = sld [smem:[#allocation7 + $0x2f]]
        %v505 = vstv %s504
        %v506 = vmul.f32 %v505, %v435
        %v507 = vadd.f32 %v503, %v506
        %s508 = sld [smem:[#allocation8 + $0xb]]
        %v509 = vstv %s508
        %v510 = vadd.f32 %v507, %v509
        %v511 = vmax.f32 %v510, 0.0
        %v512 = vld [vmem:[%s263] sm:$0x1]
        %vm513 = vcmask 1041408
        %v514 = vsel %vm513, %v454, 0.0
        %v515 = vrot.slane %v514, 4
        %v516 = vadd.f32 %v514, %v515
        %v517 = vrot.slane %v516, 2
        %v518 = vadd.f32 %v516, %v517
        %v519 = vrot.slane %v518, 1
        %v520 = vadd.f32 %v518, %v519
        %v521 = vadd.f32 %v512, %v520
        %522 = vst [vmem:[%s263] sm:$0x1] %v521
        %v523 = vld [vmem:[%s270] sm:$0x1]
        %v524 = vmul.f32 %v454, %v454
        %v525 = vsel %vm513, %v524, 0.0
        %v526 = vrot.slane %v525, 4
        %v527 = vadd.f32 %v525, %v526
        %v528 = vrot.slane %v527, 2
        %v529 = vadd.f32 %v527, %v528
        %v530 = vrot.slane %v529, 1
        %v531 = vadd.f32 %v529, %v530
        %v532 = vadd.f32 %v523, %v531
        %533 = vst [vmem:[%s270] sm:$0x1] %v532
        %v534 = vld [vmem:[%s263 + $0x1] sm:$0x1]
        %v535 = vsel %vm513, %v473, 0.0
        %v536 = vrot.slane %v535, 4
        %v537 = vadd.f32 %v535, %v536
        %v538 = vrot.slane %v537, 2
        %v539 = vadd.f32 %v537, %v538
        %v540 = vrot.slane %v539, 1
        %v541 = vadd.f32 %v539, %v540
        %v542 = vadd.f32 %v534, %v541
        %543 = vst [vmem:[%s263 + $0x1] sm:$0x1] %v542
        %v544 = vld [vmem:[%s270 + $0x1] sm:$0x1]
        %v545 = vmul.f32 %v473, %v473
        %v546 = vsel %vm513, %v545, 0.0
        %v547 = vrot.slane %v546, 4
        %v548 = vadd.f32 %v546, %v547
        %v549 = vrot.slane %v548, 2
        %v550 = vadd.f32 %v548, %v549
        %v551 = vrot.slane %v550, 1
        %v552 = vadd.f32 %v550, %v551
        %v553 = vadd.f32 %v544, %v552
        %554 = vst [vmem:[%s270 + $0x1] sm:$0x1] %v553
        %v555 = vld [vmem:[%s263 + $0x2] sm:$0x1]
        %v556 = vsel %vm513, %v492, 0.0
        %v557 = vrot.slane %v556, 4
        %v558 = vadd.f32 %v556, %v557
        %v559 = vrot.slane %v558, 2
        %v560 = vadd.f32 %v558, %v559
        %v561 = vrot.slane %v560, 1
        %v562 = vadd.f32 %v560, %v561
        %v563 = vadd.f32 %v555, %v562
        %564 = vst [vmem:[%s263 + $0x2] sm:$0x1] %v563
        %v565 = vld [vmem:[%s270 + $0x2] sm:$0x1]
        %v566 = vmul.f32 %v492, %v492
        %v567 = vsel %vm513, %v566, 0.0
        %v568 = vrot.slane %v567, 4
        %v569 = vadd.f32 %v567, %v568
        %v570 = vrot.slane %v569, 2
        %v571 = vadd.f32 %v569, %v570
        %v572 = vrot.slane %v571, 1
        %v573 = vadd.f32 %v571, %v572
        %v574 = vadd.f32 %v565, %v573
        %575 = vst [vmem:[%s270 + $0x2] sm:$0x1] %v574
        %v576 = vld [vmem:[%s263 + $0x3] sm:$0x1]
        %v577 = vsel %vm513, %v511, 0.0
        %v578 = vrot.slane %v577, 4
        %v579 = vadd.f32 %v577, %v578
        %v580 = vrot.slane %v579, 2
        %v581 = vadd.f32 %v579, %v580
        %v582 = vrot.slane %v581, 1
        %v583 = vadd.f32 %v581, %v582
        %v584 = vadd.f32 %v576, %v583
        %585 = vst [vmem:[%s263 + $0x3] sm:$0x1] %v584
        %v586 = vld [vmem:[%s270 + $0x3] sm:$0x1]
        %v587 = vmul.f32 %v511, %v511
        %v588 = vsel %vm513, %v587, 0.0
        %v589 = vrot.slane %v588, 4
        %v590 = vadd.f32 %v588, %v589
        %v591 = vrot.slane %v590, 2
        %v592 = vadd.f32 %v590, %v591
        %v593 = vrot.slane %v592, 1
        %v594 = vadd.f32 %v592, %v593
        %v595 = vadd.f32 %v586, %v594
        %596 = vst [vmem:[%s270 + $0x3] sm:$0x1] %v595
        %s597 = sand.u32 %s117, 1
        %s598 = scalar_lea.sflag [#allocation4], %s597
        %s599 = sand.u32 %s117, 1
        %s600 = smul.addr %s599, 4
        %s601 = scalar_lea.vmem [#allocation9], %s600
        %s602 = sand.u32 %s143, 1
        %s603 = scalar_lea.sflag [#allocation11], %s602
        %s604 = sand.u32 %s143, 1
        %s605 = smul.addr %s604, 4
        %s606 = scalar_lea.vmem [#allocation10], %s605
        // Predicated region
        $region49: #{tpu_custom_call.1} parent=31 // pred_check
          %p607 = pneg %p127
        $region50: #{tpu_custom_call.1} parent=31 // pred_check_branch
          %609 = sbr.rel (%p607) target = $region52
        $region51: #{tpu_custom_call.1} parent=31 // pred_region
          %611 = vsyncadd %s598, 0
          %s612 = smul.addr %s31, 4
          %s613 = scalar_lea.hbm %s3, %s612
          %s615 = sshll.u32 %s601, 4
          %s616 = int_to_ptr.vmem [resolvable:$true] %s615
          %s617 = sshll.u32 %s613, 4
          %s618 = int_to_ptr.hbm [resolvable:$true] %s617
          %620 = dma.vmem_to_hbm [thread:$0]  %s616, 64, %s618, %s598
        $region52: #{tpu_custom_call.1} parent=31 // pred_fallthru
          _
        // Predicated region
        $region53: #{tpu_custom_call.1} parent=31 // pred_check
          %p621 = pneg %p153
        $region54: #{tpu_custom_call.1} parent=31 // pred_check_branch
          %623 = sbr.rel (%p621) target = $region56
        $region55: #{tpu_custom_call.1} parent=31 // pred_region
          %625 = vsyncadd %s603, 0
          %s626 = smul.addr %s31, 4
          %s627 = scalar_lea.hbm %s4, %s626
          %s629 = sshll.u32 %s606, 4
          %s630 = int_to_ptr.vmem [resolvable:$true] %s629
          %s631 = sshll.u32 %s627, 4
          %s632 = int_to_ptr.hbm [resolvable:$true] %s631
          %634 = dma.vmem_to_hbm [thread:$0]  %s630, 64, %s632, %s603
        $region56: #{tpu_custom_call.1} parent=31 // pred_fallthru
          _
      $region32: #{tpu_custom_call.1} parent=5 // pred_fallthru
        _
      %p635 = scmp.le.s32.totalorder 2, %s22
      // Predicated region
      $region57: #{tpu_custom_call.1} parent=5 // pred_check
        %p636 = pneg %p635
      $region58: #{tpu_custom_call.1} parent=5 // pred_check_branch
        %638 = sbr.rel (%p636) target = $region60
      $region59: #{tpu_custom_call.1} parent=5 // pred_region
        %s639 = ssub.s32 %s22, 2
        // Predicated region
        $region61: #{tpu_custom_call.1} parent=59 // pred_check
          %p640 = pneg %p133
        $region62: #{tpu_custom_call.1} parent=59 // pred_check_branch
          %642 = sbr.rel (%p640) target = $region64
        $region63: #{tpu_custom_call.1} parent=59 // pred_region
          %s643 = sand.u32 %s118, 1
          %s644 = scalar_lea.sflag [#allocation4], %s643
          %s645 = sand.u32 %s118, 1
          %s646 = smul.addr %s645, 4
          %s647 = scalar_lea.vmem [#allocation9], %s646
          %649 = dma.done %s644, 64
        $region64: #{tpu_custom_call.1} parent=59 // pred_fallthru
          _
        // Predicated region
        $region65: #{tpu_custom_call.1} parent=59 // pred_check
          %p650 = pneg %p159
        $region66: #{tpu_custom_call.1} parent=59 // pred_check_branch
          %652 = sbr.rel (%p650) target = $region68
        $region67: #{tpu_custom_call.1} parent=59 // pred_region
          %s653 = sand.u32 %s144, 1
          %s654 = scalar_lea.sflag [#allocation11], %s653
          %s655 = sand.u32 %s144, 1
          %s656 = smul.addr %s655, 4
          %s657 = scalar_lea.vmem [#allocation10], %s656
          %659 = dma.done %s654, 64
        $region68: #{tpu_custom_call.1} parent=59 // pred_fallthru
          _
      $region60: #{tpu_custom_call.1} parent=5 // pred_fallthru
        _
    $region6: #{tpu_custom_call.1} parent=1 // loop_footer
      %s26 = sadd.s32 1, %s22
    $region7: #{tpu_custom_call.1} parent=1 // loop_footer_branch
      %21 = sbr.rel target = $region3
    $region8: #{tpu_custom_call.1} parent=1 // loop_exit
      _
    %660 = vsyncpa [#allocation3], 1
    %s661 = scalar_lea.sflag [#allocation3], 1
    %662 = vsyncpa %s661, 1
    %663 = vsyncpa [#allocation4], 1
    %s664 = scalar_lea.sflag [#allocation4], 1
    %665 = vsyncpa %s664, 1
    %666 = vsyncpa [#allocation11], 1
    %s667 = scalar_lea.sflag [#allocation11], 1
    %668 = vsyncpa %s667, 1
    %669 = vsyncpa [#allocation5], 1
    %s670 = scalar_lea.sflag [#allocation5], 1
    %671 = vsyncpa %s670, 1
    %672 = vsyncpa [#allocation6], 1
    %s673 = scalar_lea.sflag [#allocation6], 1
    %674 = vsyncpa %s673, 1

</llo_original>
